<compile_context>
chip_gen: v5e
topology: v5e:2x2
jax: 0.10.0
libtpu: 0.0.40
codegen_flags: <defaults>
</compile_context>

<pallas_src>
import jax
import jax.numpy as jnp
from jax.experimental import pallas as pl
from jax.experimental.pallas import tpu as pltpu

IN_DIM = 2
HIDDEN = 50
OUT_DIM = 2
H_PAD = 128          # hidden padded to one full lane width
TILE_B_MAX = 1024    # rows per grid step (1024*128*4B ≈ 0.5 MiB live in VMEM)


def _round_up(n, m):
    return ((n + m - 1) // m) * m


def mlp_kernel(x_ref, w1_ref, b1_ref, w2_ref, b2_ref, o_ref):
    x = x_ref[...]                                   # (tile_b, 2)
    w1 = w1_ref[...]                                 # (2, 128) padded
    # fc1: K=2 contraction done as two VPU broadcast-multiply-adds
    # (avoids MXU push/pop latency for a 2-deep contraction).
    h = x[:, 0:1] * w1[0:1, :] + x[:, 1:2] * w1[1:2, :] + b1_ref[...]
    h = jnp.maximum(h, 0.0)                          # ReLU (padding cols stay 0)
    # fc2: (tile_b, 128) @ (128, 2) on the MXU
    y = jnp.dot(h, w2_ref[...], preferred_element_type=jnp.float32)
    y = y + b2_ref[...]
    o_ref[...] = y.astype(o_ref.dtype)


def prepare_params(w1, b1, w2, b2):
    """One-time layout prep: transpose to (in, out) and zero-pad hidden to 128.

    w1: (50, 2), b1: (50,), w2: (2, 50), b2: (2,)  -- PyTorch nn.Linear layout.
    """
    w1p = jnp.zeros((IN_DIM, H_PAD), jnp.float32).at[:, :HIDDEN].set(w1.T)
    b1p = jnp.zeros((1, H_PAD), jnp.float32).at[:, :HIDDEN].set(b1)
    w2p = jnp.zeros((H_PAD, OUT_DIM), jnp.float32).at[:HIDDEN, :].set(w2.T)
    b2p = b2.reshape(1, OUT_DIM).astype(jnp.float32)
    return w1p, b1p, w2p, b2p


def net_forward(x, prepared_params):
    """Pallas equivalent of Net.forward. x: (B, 2) float32."""
    w1p, b1p, w2p, b2p = prepared_params
    B = x.shape[0]

    # Tile the batch; pad B so every tile is full (sublane-aligned, >= 8 rows).
    tile_b = min(TILE_B_MAX, _round_up(B, 8))
    b_pad = _round_up(B, tile_b)
    if b_pad != B:
        x = jnp.pad(x, ((0, b_pad - B), (0, 0)))
    grid = (b_pad // tile_b,)

    out = pl.pallas_call(
        mlp_kernel,
        out_shape=jax.ShapeDtypeStruct((b_pad, OUT_DIM), x.dtype),
        grid=grid,
        in_specs=[
            pl.BlockSpec((tile_b, IN_DIM), lambda i: (i, 0)),   # x: tiled over batch
            pl.BlockSpec(w1p.shape, lambda i: (0, 0)),          # weights: resident
            pl.BlockSpec(b1p.shape, lambda i: (0, 0)),
            pl.BlockSpec(w2p.shape, lambda i: (0, 0)),
            pl.BlockSpec(b2p.shape, lambda i: (0, 0)),
        ],
        out_specs=pl.BlockSpec((tile_b, OUT_DIM), lambda i: (i, 0)),
        compiler_params=pltpu.CompilerParams(
            dimension_semantics=("parallel",),  # shard batch tiles across TCs (v7x)
        ),
    )(x, w1p, b1p, w2p, b2p)
    return out[:B]


def init_params(key):
    """Deterministic init mimicking PyTorch nn.Linear default (U(-1/sqrt(fan_in), ...))."""
    k1, k2, k3, k4 = jax.random.split(key, 4)
    bound1 = 1.0 / jnp.sqrt(2.0)
    bound2 = 1.0 / jnp.sqrt(50.0)
    w1 = jax.random.uniform(k1, (HIDDEN, IN_DIM), jnp.float32, -bound1, bound1)
    b1 = jax.random.uniform(k2, (HIDDEN,), jnp.float32, -bound1, bound1)
    w2 = jax.random.uniform(k3, (OUT_DIM, HIDDEN), jnp.float32, -bound2, bound2)
    b2 = jax.random.uniform(k4, (OUT_DIM,), jnp.float32, -bound2, bound2)
    return w1, b1, w2, b2


if __name__ == "__main__":
    key = jax.random.PRNGKey(0)
    kx, kp = jax.random.split(key)

    B = 8
    x = jax.random.normal(kx, (B, IN_DIM), jnp.float32)
    w1, b1, w2, b2 = init_params(kp)

    params = prepare_params(w1, b1, w2, b2)   # one-time layout prep (not per call)
    y = net_forward(x, params)
    jax.block_until_ready(y)

    # pure-JAX reference check against the original (untransposed, unpadded) params
    h_ref = jnp.maximum(x @ w1.T + b1, 0.0)
    y_ref = h_ref @ w2.T + b2
    assert y.shape == (B, OUT_DIM)
    assert jnp.allclose(y, y_ref, atol=1e-5, rtol=1e-5)

    print("KERNEL_OK")
</pallas_src>

<mosaic_0001>
module attributes {stable_mosaic.version = 11 : i64} {
  func.func @mlp_kernel(%arg0: i32, %arg1: memref<8x2xf32, #tpu.memory_space<vmem>>, %arg2: memref<2x128xf32, #tpu.memory_space<vmem>>, %arg3: memref<1x128xf32, #tpu.memory_space<vmem>>, %arg4: memref<128x2xf32, #tpu.memory_space<vmem>>, %arg5: memref<1x2xf32, #tpu.memory_space<vmem>>, %arg6: memref<8x2xf32, #tpu.memory_space<vmem>>) attributes {dimension_semantics = [#tpu.dimension_semantics<parallel>], iteration_bounds = array<i64: 1>, scalar_prefetch = 0 : i64, scratch_operands = 0 : i64, tpu.core_type = #tpu.core_type<tc>, window_params = [{transform_indices = @transform_0, window_bounds = array<i64: 8, 2>}, {pipeline_mode = #tpu.pipeline_mode<synchronous>, transform_indices = @transform_1, window_bounds = array<i64: 2, 128>}, {pipeline_mode = #tpu.pipeline_mode<synchronous>, transform_indices = @transform_2, window_bounds = array<i64: 1, 128>}, {pipeline_mode = #tpu.pipeline_mode<synchronous>, transform_indices = @transform_3, window_bounds = array<i64: 128, 2>}, {pipeline_mode = #tpu.pipeline_mode<synchronous>, transform_indices = @transform_4, window_bounds = array<i64: 1, 2>}, {transform_indices = @transform_5, window_bounds = array<i64: 8, 2>}]} {
    %c0 = arith.constant 0 : index
    %c0_0 = arith.constant 0 : index
    %0 = vector.load %arg1[%c0, %c0_0] : memref<8x2xf32, #tpu.memory_space<vmem>>, vector<8x2xf32>
    %c0_1 = arith.constant 0 : index
    %c0_2 = arith.constant 0 : index
    %1 = vector.load %arg2[%c0_1, %c0_2] : memref<2x128xf32, #tpu.memory_space<vmem>>, vector<2x128xf32>
    %2 = vector.extract_strided_slice %0 {offsets = [0, 0], sizes = [8, 1], strides = [1, 1]} : vector<8x2xf32> to vector<8x1xf32>
    %3 = vector.extract_strided_slice %1 {offsets = [0, 0], sizes = [1, 128], strides = [1, 1]} : vector<2x128xf32> to vector<1x128xf32>
    %4 = vector.broadcast %2 : vector<8x1xf32> to vector<8x128xf32>
    %5 = vector.broadcast %3 : vector<1x128xf32> to vector<8x128xf32>
    %6 = arith.mulf %4, %5 : vector<8x128xf32>
    %7 = vector.extract_strided_slice %0 {offsets = [0, 1], sizes = [8, 1], strides = [1, 1]} : vector<8x2xf32> to vector<8x1xf32>
    %8 = vector.extract_strided_slice %1 {offsets = [1, 0], sizes = [1, 128], strides = [1, 1]} : vector<2x128xf32> to vector<1x128xf32>
    %9 = vector.broadcast %7 : vector<8x1xf32> to vector<8x128xf32>
    %10 = vector.broadcast %8 : vector<1x128xf32> to vector<8x128xf32>
    %11 = arith.mulf %9, %10 : vector<8x128xf32>
    %12 = arith.addf %6, %11 : vector<8x128xf32>
    %c0_3 = arith.constant 0 : index
    %c0_4 = arith.constant 0 : index
    %13 = vector.load %arg3[%c0_3, %c0_4] : memref<1x128xf32, #tpu.memory_space<vmem>>, vector<1x128xf32>
    %14 = vector.broadcast %13 : vector<1x128xf32> to vector<8x128xf32>
    %15 = arith.addf %12, %14 : vector<8x128xf32>
    %cst = arith.constant 0.000000e+00 : f32
    %16 = vector.broadcast %cst : f32 to vector<8x128xf32>
    %17 = arith.maximumf %15, %16 : vector<8x128xf32>
    %c0_5 = arith.constant 0 : index
    %c0_6 = arith.constant 0 : index
    %18 = vector.load %arg4[%c0_5, %c0_6] : memref<128x2xf32, #tpu.memory_space<vmem>>, vector<128x2xf32>
    %cst_7 = arith.constant dense<0.000000e+00> : vector<8x2xf32>
    %19 = tpu.matmul %17, %18, %cst_7 {dimension_numbers = #tpu.dot_dimension_numbers<[1], [0], [0], [1], [0, 0, 1, 1], [], []>} : vector<8x128xf32>, vector<128x2xf32>, vector<8x2xf32> -> vector<8x2xf32>
    %c0_8 = arith.constant 0 : index
    %c0_9 = arith.constant 0 : index
    %20 = vector.load %arg5[%c0_8, %c0_9] : memref<1x2xf32, #tpu.memory_space<vmem>>, vector<1x2xf32>
    %21 = vector.broadcast %20 : vector<1x2xf32> to vector<8x2xf32>
    %22 = arith.addf %19, %21 : vector<8x2xf32>
    %c0_10 = arith.constant 0 : index
    %c0_11 = arith.constant 0 : index
    %23 = vector.load %arg6[%c0_10, %c0_11] : memref<8x2xf32, #tpu.memory_space<vmem>>, vector<8x2xf32>
    tpu.vector_store %arg6[%c0_10, %c0_11], %22 {strides = array<i32>} : memref<8x2xf32, #tpu.memory_space<vmem>>, vector<8x2xf32>,
    return
  }
  func.func @transform_0(%arg0: i32) -> (i32, i32) {
    %c0_i32 = arith.constant 0 : i32
    %c0_i32_0 = arith.constant 0 : i32
    return %arg0, %c0_i32 : i32, i32
  }
  func.func @transform_1(%arg0: i32) -> (i32, i32) {
    %c0_i32 = arith.constant 0 : i32
    %c0_i32_0 = arith.constant 0 : i32
    %c0_i32_1 = arith.constant 0 : i32
    return %c0_i32, %c0_i32_0 : i32, i32
  }
  func.func @transform_2(%arg0: i32) -> (i32, i32) {
    %c0_i32 = arith.constant 0 : i32
    %c0_i32_0 = arith.constant 0 : i32
    %c0_i32_1 = arith.constant 0 : i32
    return %c0_i32, %c0_i32_0 : i32, i32
  }
  func.func @transform_3(%arg0: i32) -> (i32, i32) {
    %c0_i32 = arith.constant 0 : i32
    %c0_i32_0 = arith.constant 0 : i32
    %c0_i32_1 = arith.constant 0 : i32
    return %c0_i32, %c0_i32_0 : i32, i32
  }
  func.func @transform_4(%arg0: i32) -> (i32, i32) {
    %c0_i32 = arith.constant 0 : i32
    %c0_i32_0 = arith.constant 0 : i32
    %c0_i32_1 = arith.constant 0 : i32
    return %c0_i32, %c0_i32_0 : i32, i32
  }
  func.func @transform_5(%arg0: i32) -> (i32, i32) {
    %c0_i32 = arith.constant 0 : i32
    %c0_i32_0 = arith.constant 0 : i32
    return %arg0, %c0_i32 : i32, i32
  }
}

</mosaic_0001>

<llo_original>
// kernel: tpu_custom_call.1
$region0: #{tpu_custom_call.1}
  #allocation0 [shape = 'u32[]', space=smem, size = 0x4, offset = 0x4, fixed_abs, tag = 'smem constant byte address 0x4 - core index']
  #allocation1 [shape = 'u32[72,128]{1,0:T(1,128)}', space=vmem, size = 0x9000, scoped, tag = 'internal scratch']
  %s0 = inlined_call_operand.vmem [shape: f32[8,2], index: 0, kind: input, shape index: {}]
  %s1 = inlined_call_operand.vmem [shape: f32[2,128], index: 1, kind: input, shape index: {}]
  %s2 = inlined_call_operand.vmem [shape: f32[1,128], index: 2, kind: input, shape index: {}]
  %s3 = inlined_call_operand.vmem [shape: f32[128,2], index: 3, kind: input, shape index: {}]
  %s4 = inlined_call_operand.vmem [shape: f32[1,2], index: 4, kind: input, shape index: {}]
  %s5 = inlined_call_operand.vmem [shape: f32[8,2], index: 5, kind: output, shape index: {}]
  %s6 = sld [smem:[#allocation0]]
  $region30: #{tpu_custom_call.1} parent=0
    _
  %s8 = ssub.s32 1, %s6
  %s9 = scalar_select 0, %s8, %s6
  // Predicated region
  $region2: #{tpu_custom_call.1} parent=0 // pred_check
    _
  $region3: #{tpu_custom_call.1} parent=0 // pred_check_branch
    %11 = sbr.rel (0) target = $region5
  $region4: #{tpu_custom_call.1} parent=0 // pred_region
    _
  $region5: #{tpu_custom_call.1} parent=0 // pred_fallthru
    _
  // Predicated region
  $region6: #{tpu_custom_call.1} parent=0 // pred_check
    _
  $region7: #{tpu_custom_call.1} parent=0 // pred_check_branch
    %13 = sbr.rel (0) target = $region9
  $region8: #{tpu_custom_call.1} parent=0 // pred_region
    _
  $region9: #{tpu_custom_call.1} parent=0 // pred_fallthru
    _
  // Predicated region
  $region10: #{tpu_custom_call.1} parent=0 // pred_check
    _
  $region11: #{tpu_custom_call.1} parent=0 // pred_check_branch
    %15 = sbr.rel (0) target = $region13
  $region12: #{tpu_custom_call.1} parent=0 // pred_region
    _
  $region13: #{tpu_custom_call.1} parent=0 // pred_fallthru
    _
  // Predicated region
  $region14: #{tpu_custom_call.1} parent=0 // pred_check
    _
  $region15: #{tpu_custom_call.1} parent=0 // pred_check_branch
    %17 = sbr.rel (0) target = $region17
  $region16: #{tpu_custom_call.1} parent=0 // pred_region
    _
  $region17: #{tpu_custom_call.1} parent=0 // pred_fallthru
    _
  // Predicated region
  $region18: #{tpu_custom_call.1} parent=0 // pred_check
    _
  $region19: #{tpu_custom_call.1} parent=0 // pred_check_branch
    %19 = sbr.rel (0) target = $region21
  $region20: #{tpu_custom_call.1} parent=0 // pred_region
    _
  $region21: #{tpu_custom_call.1} parent=0 // pred_fallthru
    _
  %v20 = vld [vmem:[%s0] sm:$0xff]
  %v21 = vld [vmem:[%s1] sm:$0x3]
  %23 = vset.pattern.permute.xlu0 0
  %24 = vperm.xlu0 %23, %v20
  %v25 = vpop.permute.xlu0 %24
  %v27 = vperm.slane %v21, 0
  %v28 = vmul.f32 %v25, %v27
  %29 = vset.pattern.permute.xlu0 1
  %30 = vperm.xlu0 %29, %v20
  %v31 = vpop.permute.xlu0 %30
  %v33 = vperm.slane %v21, 1
  %v34 = vmul.f32 %v31, %v33
  %v35 = vadd.f32 %v28, %v34
  %v36 = vld [vmem:[%s2] sm:$0x1]
  %v38 = vperm.slane %v36, 0
  %v40 = vadd.f32 %v35, %v38
  %v41 = vmax.f32 %v40, 0.0
  %v42 = vld [vmem:[%s3] sm:$0xff]
  %v43 = vld [vmem:[%s3 + $0x8] sm:$0xff]
  %v44 = vld [vmem:[%s3 + $0x10] sm:$0xff]
  %v45 = vld [vmem:[%s3 + $0x18] sm:$0xff]
  %v46 = vld [vmem:[%s3 + $0x20] sm:$0xff]
  %v47 = vld [vmem:[%s3 + $0x28] sm:$0xff]
  %v48 = vld [vmem:[%s3 + $0x30] sm:$0xff]
  %v49 = vld [vmem:[%s3 + $0x38] sm:$0xff]
  %v50 = vld [vmem:[%s3 + $0x40] sm:$0xff]
  %v51 = vld [vmem:[%s3 + $0x48] sm:$0xff]
  %v52 = vld [vmem:[%s3 + $0x50] sm:$0xff]
  %v53 = vld [vmem:[%s3 + $0x58] sm:$0xff]
  %v54 = vld [vmem:[%s3 + $0x60] sm:$0xff]
  %v55 = vld [vmem:[%s3 + $0x68] sm:$0xff]
  %v56 = vld [vmem:[%s3 + $0x70] sm:$0xff]
  %v57 = vld [vmem:[%s3 + $0x78] sm:$0xff]
  %v58 = vld [vmem:[%s4] sm:$0x1]
  %v60 = vperm.slane %v58, 0
  %62 = vmatpush.msra.mxu0 %v57
  %63 = vmatpush.msra.mxu0 %v56
  %64 = vmatpush.msra.mxu0 %v55
  %65 = vmatpush.msra.mxu0 %v54
  %66 = vmatpush.msra.mxu0 %v53
  %67 = vmatpush.msra.mxu0 %v52
  %68 = vmatpush.msra.mxu0 %v51
  %69 = vmatpush.msra.mxu0 %v50
  %70 = vmatpush.msra.mxu0 %v49
  %71 = vmatpush.msra.mxu0 %v48
  %72 = vmatpush.msra.mxu0 %v47
  %73 = vmatpush.msra.mxu0 %v46
  %74 = vmatpush.msra.mxu0 %v45
  %75 = vmatpush.msra.mxu0 %v44
  %76 = vmatpush.msra.mxu0 %v43
  %77 = vmatpush.msra.mxu0 %v42
  %78 = vmatmul.f32.gmra.mxu0 %v41
  %v79 = vpop.f32.mrf.mxu0
  %v80 = vadd.f32 %v60, %v79
  %81 = vdwg.mxu0
  %vm82 = vcmask 15360
  %83 = vst.msk [vmem:[%s5] sm:$0xff] %vm82, %v80
  // Predicated region
  $region22: #{tpu_custom_call.1} parent=0 // pred_check
    _
  $region23: #{tpu_custom_call.1} parent=0 // pred_check_branch
    %85 = sbr.rel (0) target = $region25
  $region24: #{tpu_custom_call.1} parent=0 // pred_region
    _
  $region25: #{tpu_custom_call.1} parent=0 // pred_fallthru
    _
  // Predicated region
  $region26: #{tpu_custom_call.1} parent=0 // pred_check
    _
  $region27: #{tpu_custom_call.1} parent=0 // pred_check_branch
    %87 = sbr.rel (0) target = $region29
  $region28: #{tpu_custom_call.1} parent=0 // pred_region
    _
  $region29: #{tpu_custom_call.1} parent=0 // pred_fallthru
    _

</llo_original>
